<compile_context>
chip_gen: v7x
topology: tpu7x:2x2x1
jax: 0.10.0
libtpu: 0.0.40
codegen_flags: <defaults>
</compile_context>

<pallas_src>
import jax
import jax.numpy as jnp
import numpy as np
from jax.experimental import pallas as pl
from jax.experimental.pallas import tpu as pltpu


# ---------------------------------------------------------------------------
# Kernel body
# ---------------------------------------------------------------------------
def _attn2_body(h, att_ref, p_ref, mask, w_h2att, b_h2att, w_alpha_row,
                out_ref, *, tanh_dtype, t_chunk):
    """One (Bb, ...) batch block.  `mask` may be None.

    h, mask, weights are already-loaded arrays; att_ref / p_ref stay as Refs
    so the T-chunk loop only loads (Bb,Tc,·) slices at a time.
    """
    f32 = jnp.float32
    Bb, T, H = p_ref.shape
    R = att_ref.shape[-1]

    # att_h = h @ W_h2att + b   — small MXU matmul (M=Bb), f32 accumulate.
    att_h = jnp.dot(h, w_h2att, preferred_element_type=f32)           # (Bb, H)
    att_h = att_h + b_h2att.astype(f32)

    wa = w_alpha_row.astype(f32)                                       # (1, H)

    # ---- pass 1: scores(Bb, T), T-chunked to bound the tanh temporary ----
    # alpha_net bias dropped: softmax is shift-invariant.
    score_chunks = []
    for t0 in range(0, T, t_chunk):
        t1 = min(t0 + t_chunk, T)
        x = p_ref[:, t0:t1, :].astype(f32) + att_h[:, None, :]         # (Bb,Tc,H)
        # bf16 EUP tanh on v6e/v7x, f32 on v5e (tanh_dtype==f32 -> no-op casts)
        d = jnp.tanh(x.astype(tanh_dtype)).astype(f32)
        score_chunks.append(jnp.sum(d * wa[None, :, :], axis=-1))      # (Bb,Tc)
    scores = score_chunks[0] if len(score_chunks) == 1 else \
        jnp.concatenate(score_chunks, axis=-1)                          # (Bb, T)

    # ---- lane-major softmax over att_size ----
    m = jnp.max(scores, axis=-1, keepdims=True)
    e = jnp.exp(scores - m)                                            # (Bb, T)

    if mask is None:
        s = jnp.sum(e, axis=-1, keepdims=True)
        w = e * pl.reciprocal(s, approx=True)
    else:
        # softmax -> *mask -> renorm collapses to e*mask / sum(e*mask)
        # (with the all-masked guard matching the PyTorch weight_sum==0 loop).
        e = e * mask.astype(f32)
        s = jnp.sum(e, axis=-1, keepdims=True)
        s = jnp.where(s == 0.0, 1.0, s)
        w = e * pl.reciprocal(s, approx=True)

    # ---- pass 2: att_res = sum_t w[b,t] * att_feats[b,t,:], T-chunked ----
    acc = jnp.zeros((Bb, R), f32)
    for t0 in range(0, T, t_chunk):
        t1 = min(t0 + t_chunk, T)
        att_c = att_ref[:, t0:t1, :].astype(f32)                        # (Bb,Tc,R)
        acc = acc + jnp.sum(att_c * w[:, t0:t1, None], axis=1)
    out_ref[...] = acc.astype(out_ref.dtype)


def _make_kernel(masked, tanh_dtype, t_chunk):
    if masked:
        def kernel(h_ref, att_ref, p_ref, mask_ref,
                   w_h2att_ref, b_h2att_ref, w_alpha_ref, out_ref):
            _attn2_body(h_ref[...], att_ref, p_ref, mask_ref[...],
                        w_h2att_ref[...], b_h2att_ref[...], w_alpha_ref[...],
                        out_ref, tanh_dtype=tanh_dtype, t_chunk=t_chunk)
    else:
        def kernel(h_ref, att_ref, p_ref,
                   w_h2att_ref, b_h2att_ref, w_alpha_ref, out_ref):
            _attn2_body(h_ref[...], att_ref, p_ref, None,
                        w_h2att_ref[...], b_h2att_ref[...], w_alpha_ref[...],
                        out_ref, tanh_dtype=tanh_dtype, t_chunk=t_chunk)
    return kernel


# ---------------------------------------------------------------------------
# Chip-aware sizing helpers
# ---------------------------------------------------------------------------
def _device_kind():
    try:
        return jax.devices()[0].device_kind.lower()
    except Exception:  # pragma: no cover
        return ""


def _vmem_budget_bytes(kind):
    # v7x: 64 MiB physical per TC -> leave plenty of headroom.
    if "v7" in kind:
        return 24 << 20
    # v5e / v6e: 128 MiB physical (default scoped limits are much lower, but
    # we raise vmem_limit_bytes explicitly below).
    return 64 << 20


def _default_tanh_dtype(kind):
    # bf16 EUP path exists on v6e / v7x; v5e and older are f32-only.
    if "v6" in kind or "v7" in kind:
        return jnp.bfloat16
    return jnp.float32


def _select_block_b(B, T, R, H, Rh, att_b, p_b, mask_b, h_b, out_b, budget):
    """Largest Bb whose double-buffered per-step working set fits `budget`."""
    per_row = 2 * T * (R * att_b + H * p_b)                  # the two big streams
    per_row += 2 * (T * mask_b + Rh * h_b + R * out_b)       # mask + h + out
    bb = max(1, int(budget // max(per_row, 1)))
    bb = min(bb, B)
    # keep >= 2 grid steps so a megacore 'parallel' batch axis has work for
    # both v7x TensorCores (negligible overhead on single-TC chips).
    if B > 1:
        bb = min(bb, pl.cdiv(B, 2))
    if bb >= 8:
        bb = (bb // 8) * 8                                    # sublane-aligned
    return max(bb, 1)


# ---------------------------------------------------------------------------
# Wrapper
# ---------------------------------------------------------------------------
def attention2_forward(h, att_feats, p_att_feats, params, att_masks=None,
                       block_b=None, t_chunk=None, tanh_dtype=None):
    """JAX/Pallas equivalent of Attention2.forward.

    params:
      w_h2att : (rnn_size, att_hid)  == torch h2att.weight.T
      b_h2att : (1, att_hid)
      w_alpha : (1, att_hid)         == torch alpha_net.weight (row)
      b_alpha : unused here (softmax is shift-invariant).
    """
    w_h2att = params["w_h2att"]
    b_h2att = params["b_h2att"].reshape(1, -1)
    w_alpha = params["w_alpha"].reshape(1, -1)

    B = att_feats.shape[0]
    R = att_feats.shape[-1]
    Rh = h.shape[-1]
    H = w_h2att.shape[1]
    att_size = att_feats.size // (B * R)

    # Keep storage dtype in HBM (bf16 welcome for the big streams); the kernel
    # upcasts in-register.
    att_f = att_feats.reshape(B, att_size, R)
    p_att = p_att_feats.reshape(B, att_size, H)
    h2 = h.reshape(B, Rh)
    mask = None if att_masks is None else att_masks.reshape(B, att_size)

    kind = _device_kind()
    if tanh_dtype is None:
        tanh_dtype = _default_tanh_dtype(kind)

    att_b = att_f.dtype.itemsize
    p_b = p_att.dtype.itemsize
    h_b = h2.dtype.itemsize
    mask_b = 0 if mask is None else mask.dtype.itemsize
    out_b = att_b

    if block_b is None:
        Bb = _select_block_b(B, att_size, R, H, Rh,
                             att_b, p_b, mask_b, h_b, out_b,
                             _vmem_budget_bytes(kind))
    else:
        Bb = max(1, min(int(block_b), B))

    Tc = min(att_size, 128) if t_chunk is None else max(1, min(int(t_chunk), att_size))

    # No padding of the big streams: uneven B is handled by Pallas partial
    # blocks (tail OOB reads are unused garbage; tail OOB stores are dropped).
    grid = (pl.cdiv(B, Bb),)

    # Explicit VMEM limit derived from the chosen tile (double-buffered).
    vmem_est = 2 * Bb * (att_size * (R * att_b + H * p_b)
                         + att_size * mask_b + Rh * h_b + R * out_b)
    vmem_est += 2 * (Rh * H + 2 * H) * 4
    vmem_limit = int(min(max(vmem_est + (4 << 20), 16 << 20), 100 << 20))
    if "v7" in kind:
        vmem_limit = min(vmem_limit, 48 << 20)

    data_specs = [
        pl.BlockSpec((Bb, Rh), lambda i: (i, 0)),               # h
        pl.BlockSpec((Bb, att_size, R), lambda i: (i, 0, 0)),    # att_feats
        pl.BlockSpec((Bb, att_size, H), lambda i: (i, 0, 0)),    # p_att_feats
    ]
    weight_specs = [
        pl.BlockSpec((Rh, H), lambda i: (0, 0)),                 # W_h2att
        pl.BlockSpec((1, H), lambda i: (0, 0)),                  # b_h2att
        pl.BlockSpec((1, H), lambda i: (0, 0)),                  # w_alpha row
    ]

    if mask is None:
        kernel = _make_kernel(False, tanh_dtype, Tc)
        in_specs = data_specs + weight_specs
        args = (h2, att_f, p_att, w_h2att, b_h2att, w_alpha)
    else:
        kernel = _make_kernel(True, tanh_dtype, Tc)
        in_specs = data_specs + [pl.BlockSpec((Bb, att_size), lambda i: (i, 0))] \
            + weight_specs
        args = (h2, att_f, p_att, mask, w_h2att, b_h2att, w_alpha)

    out = pl.pallas_call(
        kernel,
        out_shape=jax.ShapeDtypeStruct((B, R), att_f.dtype),
        grid_spec=pltpu.PrefetchScalarGridSpec(
            num_scalar_prefetch=0,
            grid=grid,
            in_specs=in_specs,
            out_specs=pl.BlockSpec((Bb, R), lambda i: (i, 0)),
        ),
        compiler_params=pltpu.CompilerParams(
            dimension_semantics=("parallel",),
            vmem_limit_bytes=vmem_limit),
    )(*args)

    return out


# ---------------------------------------------------------------------------
# Pure-JAX reference mirroring the PyTorch forward (uses b_alpha too)
# ---------------------------------------------------------------------------
def attention2_reference(h, att_feats, p_att_feats, params, att_masks=None):
    w_h2att, b_h2att = params["w_h2att"], params["b_h2att"]
    w_alpha, b_alpha = params["w_alpha"], params["b_alpha"]
    B = att_feats.shape[0]
    R = att_feats.shape[-1]
    H = w_h2att.shape[1]
    att_size = att_feats.size // (B * R)

    p = p_att_feats.reshape(B, att_size, H).astype(jnp.float32)
    att_h = h.astype(jnp.float32) @ w_h2att + b_h2att                 # (B, H)
    dot = jnp.tanh(p + att_h[:, None, :])                             # (B, T, H)
    scores = jnp.einsum("bth,h->bt", dot, w_alpha.reshape(-1).astype(jnp.float32))
    scores = scores + b_alpha.reshape(())
    weight = jax.nn.softmax(scores, axis=1)
    if att_masks is not None:
        weight = weight * att_masks.reshape(B, att_size).astype(jnp.float32)
        wsum = weight.sum(1, keepdims=True)
        wsum = jnp.where(wsum == 0.0, 1.0, wsum)
        weight = weight / wsum
    att_f = att_feats.reshape(B, att_size, R).astype(jnp.float32)
    return jnp.einsum("bt,btr->br", weight, att_f)


# ---------------------------------------------------------------------------
# Self-test
# ---------------------------------------------------------------------------
if __name__ == "__main__":
    B = 16           # -> 2 grid steps of Bb=8 (auto-selected)
    rnn_size = 32
    att_hid = 32
    att_size = 16    # 4x4 spatial grid of attention features

    key = jax.random.PRNGKey(0)
    k = jax.random.split(key, 8)

    bound_h = 1.0 / np.sqrt(rnn_size)
    bound_a = 1.0 / np.sqrt(att_hid)
    params = {
        "w_h2att": jax.random.uniform(k[0], (rnn_size, att_hid), jnp.float32, -bound_h, bound_h),
        "b_h2att": jax.random.uniform(k[1], (1, att_hid), jnp.float32, -bound_h, bound_h),
        "w_alpha": jax.random.uniform(k[2], (1, att_hid), jnp.float32, -bound_a, bound_a),
        "b_alpha": jax.random.uniform(k[3], (1, 1), jnp.float32, -bound_a, bound_a),
    }

    h = jax.random.normal(k[4], (B, rnn_size), jnp.float32)
    att_feats = jax.random.normal(k[5], (B, 4, 4, rnn_size), jnp.float32)     # att_size = 16
    p_att_feats = jax.random.normal(k[6], (B, att_size, att_hid), jnp.float32)

    # Mask: row 0 fully visible, row 1 second half masked, row 2 fully masked
    # (exercises the weight_sum==0 guard), rest random 0/1.
    rand_mask = (jax.random.uniform(k[7], (B, att_size)) > 0.3).astype(jnp.float32)
    att_masks = rand_mask.at[0].set(1.0)
    att_masks = att_masks.at[1, : att_size // 2].set(1.0)
    att_masks = att_masks.at[1, att_size // 2:].set(0.0)
    att_masks = att_masks.at[2].set(0.0)

    # 1) Masked path, exact-math config (f32 tanh) with 2 T-chunks exercised.
    out = jax.block_until_ready(
        attention2_forward(h, att_feats, p_att_feats, params, att_masks,
                           t_chunk=8, tanh_dtype=jnp.float32))
    ref = attention2_reference(h, att_feats, p_att_feats, params, att_masks)
    np.testing.assert_allclose(np.asarray(out), np.asarray(ref), rtol=2e-3, atol=2e-3)

    # 2) No-mask path (separate compiled variant, no ones-mask DMA).
    out_nm = jax.block_until_ready(
        attention2_forward(h, att_feats, p_att_feats, params, None,
                           tanh_dtype=jnp.float32))
    ref_nm = attention2_reference(h, att_feats, p_att_feats, params, None)
    np.testing.assert_allclose(np.asarray(out_nm), np.asarray(ref_nm), rtol=2e-3, atol=2e-3)

    # 3) Performance-mode smoke test: bf16 big streams, chip-default tanh dtype
    #    (bf16 on v6e/v7x), and an uneven batch (B=13, Bb=8) so the no-pad
    #    partial-tail-block path is exercised.
    Bu = 13
    att_bf = att_feats[:Bu].astype(jnp.bfloat16)
    p_bf = p_att_feats[:Bu].astype(jnp.bfloat16)
    out_bf = jax.block_until_ready(
        attention2_forward(h[:Bu], att_bf, p_bf, params, att_masks[:Bu], block_b=8))
    ref_bf = attention2_reference(h[:Bu], att_bf, p_bf, params, att_masks[:Bu])
    np.testing.assert_allclose(np.asarray(out_bf, dtype=np.float32),
                               np.asarray(ref_bf), rtol=3e-2, atol=3e-2)

    print("KERNEL_OK")
</pallas_src>

<mosaic_0001>
module attributes {stable_mosaic.version = 11 : i64} {
  func.func @kernel(%arg0: i32, %arg1: memref<8x32xf32, #tpu.memory_space<vmem>>, %arg2: memref<8x16x32xf32, #tpu.memory_space<vmem>>, %arg3: memref<8x16x32xf32, #tpu.memory_space<vmem>>, %arg4: memref<8x16xf32, #tpu.memory_space<vmem>>, %arg5: memref<32x32xf32, #tpu.memory_space<vmem>>, %arg6: memref<1x32xf32, #tpu.memory_space<vmem>>, %arg7: memref<1x32xf32, #tpu.memory_space<vmem>>, %arg8: memref<8x32xf32, #tpu.memory_space<vmem>>) attributes {dimension_semantics = [#tpu.dimension_semantics<parallel>], iteration_bounds = array<i64: 2>, scalar_prefetch = 0 : i64, scratch_operands = 0 : i64, tpu.core_type = #tpu.core_type<tc>, window_params = [{transform_indices = @transform_0, window_bounds = array<i64: 8, 32>}, {transform_indices = @transform_1, window_bounds = array<i64: 8, 16, 32>}, {transform_indices = @transform_2, window_bounds = array<i64: 8, 16, 32>}, {transform_indices = @transform_3, window_bounds = array<i64: 8, 16>}, {pipeline_mode = #tpu.pipeline_mode<synchronous>, transform_indices = @transform_4, window_bounds = array<i64: 32, 32>}, {pipeline_mode = #tpu.pipeline_mode<synchronous>, transform_indices = @transform_5, window_bounds = array<i64: 1, 32>}, {pipeline_mode = #tpu.pipeline_mode<synchronous>, transform_indices = @transform_6, window_bounds = array<i64: 1, 32>}, {transform_indices = @transform_7, window_bounds = array<i64: 8, 32>}]} {
    %c0 = arith.constant 0 : index
    %c0_0 = arith.constant 0 : index
    %0 = vector.load %arg1[%c0, %c0_0] : memref<8x32xf32, #tpu.memory_space<vmem>>, vector<8x32xf32>
    %c0_1 = arith.constant 0 : index
    %c0_2 = arith.constant 0 : index
    %1 = vector.load %arg4[%c0_1, %c0_2] : memref<8x16xf32, #tpu.memory_space<vmem>>, vector<8x16xf32>
    %c0_3 = arith.constant 0 : index
    %c0_4 = arith.constant 0 : index
    %2 = vector.load %arg5[%c0_3, %c0_4] : memref<32x32xf32, #tpu.memory_space<vmem>>, vector<32x32xf32>
    %c0_5 = arith.constant 0 : index
    %c0_6 = arith.constant 0 : index
    %3 = vector.load %arg6[%c0_5, %c0_6] : memref<1x32xf32, #tpu.memory_space<vmem>>, vector<1x32xf32>
    %c0_7 = arith.constant 0 : index
    %c0_8 = arith.constant 0 : index
    %4 = vector.load %arg7[%c0_7, %c0_8] : memref<1x32xf32, #tpu.memory_space<vmem>>, vector<1x32xf32>
    %cst = arith.constant dense<0.000000e+00> : vector<8x32xf32>
    %5 = tpu.matmul %0, %2, %cst {dimension_numbers = #tpu.dot_dimension_numbers<[1], [0], [0], [1], [0, 0, 1, 1], [], []>} : vector<8x32xf32>, vector<32x32xf32>, vector<8x32xf32> -> vector<8x32xf32>
    %6 = vector.broadcast %3 : vector<1x32xf32> to vector<8x32xf32>
    %7 = arith.addf %5, %6 : vector<8x32xf32>
    %c0_9 = arith.constant 0 : index
    %c0_10 = arith.constant 0 : index
    %c0_11 = arith.constant 0 : index
    %8 = vector.load %arg3[%c0_9, %c0_10, %c0_11] : memref<8x16x32xf32, #tpu.memory_space<vmem>>, vector<8x8x32xf32>
    %9 = vector.shape_cast %7 : vector<8x32xf32> to vector<8x1x32xf32>
    %10 = vector.broadcast %9 : vector<8x1x32xf32> to vector<8x8x32xf32>
    %11 = arith.addf %8, %10 : vector<8x8x32xf32>
    %12 = math.tanh %11 : vector<8x8x32xf32>
    %13 = vector.shape_cast %4 : vector<1x32xf32> to vector<1x1x32xf32>
    %14 = vector.broadcast %13 : vector<1x1x32xf32> to vector<8x8x32xf32>
    %15 = arith.mulf %12, %14 : vector<8x8x32xf32>
    %cst_12 = arith.constant dense<0.000000e+00> : vector<8x8xf32>
    %16 = vector.multi_reduction <add>, %15, %cst_12 [2] : vector<8x8x32xf32> to vector<8x8xf32>
    %c0_13 = arith.constant 0 : index
    %c8 = arith.constant 8 : index
    %c0_14 = arith.constant 0 : index
    %17 = vector.load %arg3[%c0_13, %c8, %c0_14] : memref<8x16x32xf32, #tpu.memory_space<vmem>>, vector<8x8x32xf32>
    %18 = vector.shape_cast %7 : vector<8x32xf32> to vector<8x1x32xf32>
    %19 = vector.broadcast %18 : vector<8x1x32xf32> to vector<8x8x32xf32>
    %20 = arith.addf %17, %19 : vector<8x8x32xf32>
    %21 = math.tanh %20 : vector<8x8x32xf32>
    %22 = vector.shape_cast %4 : vector<1x32xf32> to vector<1x1x32xf32>
    %23 = vector.broadcast %22 : vector<1x1x32xf32> to vector<8x8x32xf32>
    %24 = arith.mulf %21, %23 : vector<8x8x32xf32>
    %cst_15 = arith.constant dense<0.000000e+00> : vector<8x8xf32>
    %25 = vector.multi_reduction <add>, %24, %cst_15 [2] : vector<8x8x32xf32> to vector<8x8xf32>
    %26 = tpu.concatenate %16, %25 in 1 : vector<8x8xf32>, vector<8x8xf32> -> vector<8x16xf32>
    %cst_16 = arith.constant dense<0xFF800000> : vector<8xf32>
    %27 = vector.multi_reduction <maximumf>, %26, %cst_16 [1] : vector<8x16xf32> to vector<8xf32>
    %28 = vector.shape_cast %27 : vector<8xf32> to vector<8x1xf32>
    %29 = vector.broadcast %28 : vector<8x1xf32> to vector<8x16xf32>
    %30 = arith.subf %26, %29 : vector<8x16xf32>
    %31 = math.exp %30 : vector<8x16xf32>
    %32 = arith.mulf %31, %1 : vector<8x16xf32>
    %cst_17 = arith.constant dense<0.000000e+00> : vector<8xf32>
    %33 = vector.multi_reduction <add>, %32, %cst_17 [1] : vector<8x16xf32> to vector<8xf32>
    %34 = vector.shape_cast %33 : vector<8xf32> to vector<8x1xf32>
    %cst_18 = arith.constant 0.000000e+00 : f32
    %35 = vector.broadcast %cst_18 : f32 to vector<8x1xf32>
    %36 = arith.cmpf oeq, %34, %35 : vector<8x1xf32>
    %cst_19 = arith.constant 1.000000e+00 : f32
    %37 = vector.broadcast %cst_19 : f32 to vector<8x1xf32>
    %38 = arith.select %36, %37, %34 : vector<8x1xi1>, vector<8x1xf32>
    %39 = tpu.reciprocal %38 {approx = true} : vector<8x1xf32> -> vector<8x1xf32>
    %40 = vector.broadcast %39 : vector<8x1xf32> to vector<8x16xf32>
    %41 = arith.mulf %32, %40 : vector<8x16xf32>
    %cst_20 = arith.constant 0.000000e+00 : f32
    %42 = vector.broadcast %cst_20 : f32 to vector<8x32xf32>
    %c0_21 = arith.constant 0 : index
    %c0_22 = arith.constant 0 : index
    %c0_23 = arith.constant 0 : index
    %43 = vector.load %arg2[%c0_21, %c0_22, %c0_23] : memref<8x16x32xf32, #tpu.memory_space<vmem>>, vector<8x8x32xf32>
    %44 = vector.extract_strided_slice %41 {offsets = [0, 0], sizes = [8, 8], strides = [1, 1]} : vector<8x16xf32> to vector<8x8xf32>
    %45 = vector.shape_cast %44 : vector<8x8xf32> to vector<8x8x1xf32>
    %46 = vector.broadcast %45 : vector<8x8x1xf32> to vector<8x8x32xf32>
    %47 = arith.mulf %43, %46 : vector<8x8x32xf32>
    %cst_24 = arith.constant dense<0.000000e+00> : vector<8x32xf32>
    %48 = vector.multi_reduction <add>, %47, %cst_24 [1] : vector<8x8x32xf32> to vector<8x32xf32>
    %49 = arith.addf %42, %48 : vector<8x32xf32>
    %c0_25 = arith.constant 0 : index
    %c8_26 = arith.constant 8 : index
    %c0_27 = arith.constant 0 : index
    %50 = vector.load %arg2[%c0_25, %c8_26, %c0_27] : memref<8x16x32xf32, #tpu.memory_space<vmem>>, vector<8x8x32xf32>
    %51 = vector.extract_strided_slice %41 {offsets = [0, 8], sizes = [8, 8], strides = [1, 1]} : vector<8x16xf32> to vector<8x8xf32>
    %52 = vector.shape_cast %51 : vector<8x8xf32> to vector<8x8x1xf32>
    %53 = vector.broadcast %52 : vector<8x8x1xf32> to vector<8x8x32xf32>
    %54 = arith.mulf %50, %53 : vector<8x8x32xf32>
    %cst_28 = arith.constant dense<0.000000e+00> : vector<8x32xf32>
    %55 = vector.multi_reduction <add>, %54, %cst_28 [1] : vector<8x8x32xf32> to vector<8x32xf32>
    %56 = arith.addf %49, %55 : vector<8x32xf32>
    %c0_29 = arith.constant 0 : index
    %c0_30 = arith.constant 0 : index
    %57 = vector.load %arg8[%c0_29, %c0_30] : memref<8x32xf32, #tpu.memory_space<vmem>>, vector<8x32xf32>
    tpu.vector_store %arg8[%c0_29, %c0_30], %56 {strides = array<i32>} : memref<8x32xf32, #tpu.memory_space<vmem>>, vector<8x32xf32>,
    return
  }
  func.func @transform_0(%arg0: i32) -> (i32, i32) {
    %c0_i32 = arith.constant 0 : i32
    %c0_i32_0 = arith.constant 0 : i32
    return %arg0, %c0_i32 : i32, i32
  }
  func.func @transform_1(%arg0: i32) -> (i32, i32, i32) {
    %c0_i32 = arith.constant 0 : i32
    %c0_i32_0 = arith.constant 0 : i32
    %c0_i32_1 = arith.constant 0 : i32
    return %arg0, %c0_i32, %c0_i32_0 : i32, i32, i32
  }
  func.func @transform_2(%arg0: i32) -> (i32, i32, i32) {
    %c0_i32 = arith.constant 0 : i32
    %c0_i32_0 = arith.constant 0 : i32
    %c0_i32_1 = arith.constant 0 : i32
    return %arg0, %c0_i32, %c0_i32_0 : i32, i32, i32
  }
  func.func @transform_3(%arg0: i32) -> (i32, i32) {
    %c0_i32 = arith.constant 0 : i32
    %c0_i32_0 = arith.constant 0 : i32
    return %arg0, %c0_i32 : i32, i32
  }
  func.func @transform_4(%arg0: i32) -> (i32, i32) {
    %c0_i32 = arith.constant 0 : i32
    %c0_i32_0 = arith.constant 0 : i32
    %c0_i32_1 = arith.constant 0 : i32
    return %c0_i32, %c0_i32_0 : i32, i32
  }
  func.func @transform_5(%arg0: i32) -> (i32, i32) {
    %c0_i32 = arith.constant 0 : i32
    %c0_i32_0 = arith.constant 0 : i32
    %c0_i32_1 = arith.constant 0 : i32
    return %c0_i32, %c0_i32_0 : i32, i32
  }
  func.func @transform_6(%arg0: i32) -> (i32, i32) {
    %c0_i32 = arith.constant 0 : i32
    %c0_i32_0 = arith.constant 0 : i32
    %c0_i32_1 = arith.constant 0 : i32
    return %c0_i32, %c0_i32_0 : i32, i32
  }
  func.func @transform_7(%arg0: i32) -> (i32, i32) {
    %c0_i32 = arith.constant 0 : i32
    %c0_i32_0 = arith.constant 0 : i32
    return %arg0, %c0_i32 : i32, i32
  }
}

</mosaic_0001>

<llo_original>
// kernel: tpu_custom_call.1
$region0: #{tpu_custom_call.1}
  #allocation0 [shape = 'u32[]', space=smem, size = 0x4, offset = 0x4, fixed_abs, tag = 'smem constant byte address 0x4 - core index']
  #allocation1 [shape = 'u32[144,128]{1,0:T(1,128)}', space=vmem, size = 0x12000, scoped, tag = 'internal scratch']
  %s0 = inlined_call_operand.hbm [shape: f32[16,32], index: 0, kind: input, shape index: {}]
  %s1 = inlined_call_operand.hbm [shape: f32[16,16,32], index: 1, kind: input, shape index: {}]
  %s2 = inlined_call_operand.hbm [shape: f32[16,16,32], index: 2, kind: input, shape index: {}]
  %s3 = inlined_call_operand.hbm [shape: f32[16,16], index: 3, kind: input, shape index: {}]
  %s4 = inlined_call_operand.hbm [shape: f32[32,32], index: 4, kind: input, shape index: {}]
  %s5 = inlined_call_operand.vmem [shape: f32[1,32], index: 5, kind: input, shape index: {}]
  %s6 = inlined_call_operand.vmem [shape: f32[1,32], index: 6, kind: input, shape index: {}]
  %s7 = inlined_call_operand.hbm [shape: f32[16,32], index: 7, kind: output, shape index: {}]
  %s8 = sld [smem:[#allocation0]]
  $region81: #{tpu_custom_call.1} parent=0
    _
  %s10 = ssub.s32 1, %s8
  %s11 = scalar_select 0, %s10, %s8
  $region1: #{tpu_custom_call.1} parent=0
    #allocation2 [shape = 'u8[8192]{0}', space=vmem, size = 0x2000, scoped, tag = 'input window, operand 0']
    #allocation3 [shape = 's32[2]{0}', space=sflag, size = 0x8, scoped, tag = 'scoped memory for tpu_custom_call.1']
    #allocation4 [shape = 's32[2]{0}', space=sflag, size = 0x8, scoped, tag = 'scoped memory for tpu_custom_call.1']
    #allocation5 [shape = 'u8[131072]{0}', space=vmem, size = 0x20000, scoped, tag = 'input window, operand 1']
    #allocation6 [shape = 's32[2]{0}', space=sflag, size = 0x8, scoped, tag = 'scoped memory for tpu_custom_call.1']
    #allocation7 [shape = 'u8[131072]{0}', space=vmem, size = 0x20000, scoped, tag = 'input window, operand 2']
    #allocation8 [shape = 'u8[8192]{0}', space=vmem, size = 0x2000, scoped, tag = 'input window, operand 3']
    #allocation9 [shape = 's32[2]{0}', space=sflag, size = 0x8, scoped, tag = 'scoped memory for tpu_custom_call.1']
    #allocation10 [shape = 'u8[16384]{0}', space=vmem, size = 0x4000, scoped, tag = 'input window, operand 4, single buffered']
    #allocation11 [shape = 'u8[8192]{0}', space=vmem, size = 0x2000, scoped, tag = 'output window, operand 0']
    %12 = vsyncpa [#allocation3], 0
    %s13 = scalar_lea.sflag [#allocation3], 1
    %14 = vsyncpa %s13, 0
    %15 = vsyncpa [#allocation6], 0
    %s16 = scalar_lea.sflag [#allocation6], 1
    %17 = vsyncpa %s16, 0
    %18 = vsyncpa [#allocation9], 0
    %s19 = scalar_lea.sflag [#allocation9], 1
    %20 = vsyncpa %s19, 0
    %21 = vsyncpa [#allocation4], 0
    %s22 = scalar_lea.sflag [#allocation4], 1
    %23 = vsyncpa %s22, 0
    loop: start=0, step=1, limit=4
    $region2: #{tpu_custom_call.1} parent=1 // loop_pre_header
      _
    $region3: #{tpu_custom_call.1} parent=1 // loop_header
      %s25 = sphi 0, %s29
      %p26 = scmp.ge.s32.totalorder %s25, 4
      %s35 = sphi 0, %s37
      %s38 = sphi 0, %s35
      %s39 = sphi 0, %s38
      %s55 = sphi 0, %s39
      %s61 = sphi 0, %s63
      %s64 = sphi 0, %s61
      %s65 = sphi 0, %s64
      %s81 = sphi 0, %s65
      %s87 = sphi 0, %s89
      %s90 = sphi 0, %s87
      %s91 = sphi 0, %s90
      %s107 = sphi 0, %s91
      %s113 = sphi 0, %s115
      %s116 = sphi 0, %s113
      %s117 = sphi 0, %s116
      %s133 = sphi 0, %s117
      %s137 = sphi 0, %s137
      %s139 = sphi 0, %s137
      %s140 = sphi 0, %s139
      %s154 = sphi 0, %s140
      %s158 = sphi 0, %s158
      %s160 = sphi 0, %s158
      %s161 = sphi 0, %s160
      %s175 = sphi 0, %s161
      %s179 = sphi 0, %s179
      %s181 = sphi 0, %s179
      %s182 = sphi 0, %s181
      %s196 = sphi 0, %s182
      %s202 = sphi 0, %s204
      %s205 = sphi 0, %s202
      %s206 = sphi 0, %s205
      %s222 = sphi 0, %s206
    $region4: #{tpu_custom_call.1} parent=1 // loop_header_branch
      %28 = sbr.rel (%p26) target = $region8
    $region5: #{tpu_custom_call.1} parent=1 // loop_body
      %s30 = ssub.s32 %s25, 1
      %s31 = ssub.s32 %s25, 2
      %s32 = sadd.s32 %s25, 1
      %s33 = ssub.s32 %s25, %s32
      %p34 = scmp.eq.s32.totalorder %s33, 0
      %s36 = sadd.s32 %s35, 1
      %s37 = scalar_select %p34, %s35, %s36
      %p40 = pneg %p34
      %p41 = scmp.eq.s32.totalorder %s25, 1
      %p42 = por %p40, %p41
      %p43 = scmp.ne.s32.totalorder %s35, %s38
      %p44 = scmp.eq.s32.totalorder %s25, 0
      %p45 = por %p43, %p44
      %p46 = scmp.ne.s32.totalorder %s35, %s38
      %p47 = scmp.eq.s32.totalorder %s30, 1
      %p48 = por %p46, %p47
      %p49 = scmp.ne.s32.totalorder %s38, %s39
      %p50 = scmp.eq.s32.totalorder %s30, 0
      %p51 = por %p49, %p50
      %p52 = scmp.ne.s32.totalorder %s38, %s39
      %p53 = scmp.eq.s32.totalorder %s31, 1
      %p54 = por %p52, %p53
      %p56 = scmp.ne.s32.totalorder %s39, %s55
      %p57 = scmp.eq.s32.totalorder %s31, 0
      %p58 = por %p56, %p57
      %s59 = ssub.s32 %s25, %s32
      %p60 = scmp.eq.s32.totalorder %s59, 0
      %s62 = sadd.s32 %s61, 1
      %s63 = scalar_select %p60, %s61, %s62
      %p66 = pneg %p60
      %p67 = scmp.eq.s32.totalorder %s25, 1
      %p68 = por %p66, %p67
      %p69 = scmp.ne.s32.totalorder %s61, %s64
      %p70 = scmp.eq.s32.totalorder %s25, 0
      %p71 = por %p69, %p70
      %p72 = scmp.ne.s32.totalorder %s61, %s64
      %p73 = scmp.eq.s32.totalorder %s30, 1
      %p74 = por %p72, %p73
      %p75 = scmp.ne.s32.totalorder %s64, %s65
      %p76 = scmp.eq.s32.totalorder %s30, 0
      %p77 = por %p75, %p76
      %p78 = scmp.ne.s32.totalorder %s64, %s65
      %p79 = scmp.eq.s32.totalorder %s31, 1
      %p80 = por %p78, %p79
      %p82 = scmp.ne.s32.totalorder %s65, %s81
      %p83 = scmp.eq.s32.totalorder %s31, 0
      %p84 = por %p82, %p83
      %s85 = ssub.s32 %s25, %s32
      %p86 = scmp.eq.s32.totalorder %s85, 0
      %s88 = sadd.s32 %s87, 1
      %s89 = scalar_select %p86, %s87, %s88
      %p92 = pneg %p86
      %p93 = scmp.eq.s32.totalorder %s25, 1
      %p94 = por %p92, %p93
      %p95 = scmp.ne.s32.totalorder %s87, %s90
      %p96 = scmp.eq.s32.totalorder %s25, 0
      %p97 = por %p95, %p96
      %p98 = scmp.ne.s32.totalorder %s87, %s90
      %p99 = scmp.eq.s32.totalorder %s30, 1
      %p100 = por %p98, %p99
      %p101 = scmp.ne.s32.totalorder %s90, %s91
      %p102 = scmp.eq.s32.totalorder %s30, 0
      %p103 = por %p101, %p102
      %p104 = scmp.ne.s32.totalorder %s90, %s91
      %p105 = scmp.eq.s32.totalorder %s31, 1
      %p106 = por %p104, %p105
      %p108 = scmp.ne.s32.totalorder %s91, %s107
      %p109 = scmp.eq.s32.totalorder %s31, 0
      %p110 = por %p108, %p109
      %s111 = ssub.s32 %s25, %s32
      %p112 = scmp.eq.s32.totalorder %s111, 0
      %s114 = sadd.s32 %s113, 1
      %s115 = scalar_select %p112, %s113, %s114
      %p118 = pneg %p112
      %p119 = scmp.eq.s32.totalorder %s25, 1
      %p120 = por %p118, %p119
      %p121 = scmp.ne.s32.totalorder %s113, %s116
      %p122 = scmp.eq.s32.totalorder %s25, 0
      %p123 = por %p121, %p122
      %p124 = scmp.ne.s32.totalorder %s113, %s116
      %p125 = scmp.eq.s32.totalorder %s30, 1
      %p126 = por %p124, %p125
      %p127 = scmp.ne.s32.totalorder %s116, %s117
      %p128 = scmp.eq.s32.totalorder %s30, 0
      %p129 = por %p127, %p128
      %p130 = scmp.ne.s32.totalorder %s116, %s117
      %p131 = scmp.eq.s32.totalorder %s31, 1
      %p132 = por %p130, %p131
      %p134 = scmp.ne.s32.totalorder %s117, %s133
      %p135 = scmp.eq.s32.totalorder %s31, 0
      %p136 = por %p134, %p135
      %s138 = sadd.s32 %s137, 1
      %p141 = scmp.eq.s32.totalorder %s25, 1
      %p142 = scmp.ne.s32.totalorder %s137, %s139
      %p143 = scmp.eq.s32.totalorder %s25, 0
      %p144 = por %p142, %p143
      %p145 = scmp.ne.s32.totalorder %s137, %s139
      %p146 = scmp.eq.s32.totalorder %s30, 1
      %p147 = por %p145, %p146
      %p148 = scmp.ne.s32.totalorder %s139, %s140
      %p149 = scmp.eq.s32.totalorder %s30, 0
      %p150 = por %p148, %p149
      %p151 = scmp.ne.s32.totalorder %s139, %s140
      %p152 = scmp.eq.s32.totalorder %s31, 1
      %p153 = por %p151, %p152
      %p155 = scmp.ne.s32.totalorder %s140, %s154
      %p156 = scmp.eq.s32.totalorder %s31, 0
      %p157 = por %p155, %p156
      %s159 = sadd.s32 %s158, 1
      %p162 = scmp.eq.s32.totalorder %s25, 1
      %p163 = scmp.ne.s32.totalorder %s158, %s160
      %p164 = scmp.eq.s32.totalorder %s25, 0
      %p165 = por %p163, %p164
      %p166 = scmp.ne.s32.totalorder %s158, %s160
      %p167 = scmp.eq.s32.totalorder %s30, 1
      %p168 = por %p166, %p167
      %p169 = scmp.ne.s32.totalorder %s160, %s161
      %p170 = scmp.eq.s32.totalorder %s30, 0
      %p171 = por %p169, %p170
      %p172 = scmp.ne.s32.totalorder %s160, %s161
      %p173 = scmp.eq.s32.totalorder %s31, 1
      %p174 = por %p172, %p173
      %p176 = scmp.ne.s32.totalorder %s161, %s175
      %p177 = scmp.eq.s32.totalorder %s31, 0
      %p178 = por %p176, %p177
      %s180 = sadd.s32 %s179, 1
      %p183 = scmp.eq.s32.totalorder %s25, 1
      %p184 = scmp.ne.s32.totalorder %s179, %s181
      %p185 = scmp.eq.s32.totalorder %s25, 0
      %p186 = por %p184, %p185
      %p187 = scmp.ne.s32.totalorder %s179, %s181
      %p188 = scmp.eq.s32.totalorder %s30, 1
      %p189 = por %p187, %p188
      %p190 = scmp.ne.s32.totalorder %s181, %s182
      %p191 = scmp.eq.s32.totalorder %s30, 0
      %p192 = por %p190, %p191
      %p193 = scmp.ne.s32.totalorder %s181, %s182
      %p194 = scmp.eq.s32.totalorder %s31, 1
      %p195 = por %p193, %p194
      %p197 = scmp.ne.s32.totalorder %s182, %s196
      %p198 = scmp.eq.s32.totalorder %s31, 0
      %p199 = por %p197, %p198
      %s200 = ssub.s32 %s25, %s32
      %p201 = scmp.eq.s32.totalorder %s200, 0
      %s203 = sadd.s32 %s202, 1
      %s204 = scalar_select %p201, %s202, %s203
      %p207 = pneg %p201
      %p208 = scmp.eq.s32.totalorder %s25, 1
      %p209 = por %p207, %p208
      %p210 = scmp.ne.s32.totalorder %s202, %s205
      %p211 = scmp.eq.s32.totalorder %s25, 0
      %p212 = por %p210, %p211
      %p213 = scmp.ne.s32.totalorder %s202, %s205
      %p214 = scmp.eq.s32.totalorder %s30, 1
      %p215 = por %p213, %p214
      %p216 = scmp.ne.s32.totalorder %s205, %s206
      %p217 = scmp.eq.s32.totalorder %s30, 0
      %p218 = por %p216, %p217
      %p219 = scmp.ne.s32.totalorder %s205, %s206
      %p220 = scmp.eq.s32.totalorder %s31, 1
      %p221 = por %p219, %p220
      %p223 = scmp.ne.s32.totalorder %s206, %s222
      %p224 = scmp.eq.s32.totalorder %s31, 0
      %p225 = por %p223, %p224
      %p226 = scmp.le.s32.totalorder 1, %s25
      %p227 = scmp.lt.s32.totalorder %s25, 3
      %p228 = pnand %p226, %p227
      %p229 = pneg %p228
      // Predicated region
      $region9: #{tpu_custom_call.1} parent=5 // pred_check
        _
      $region10: #{tpu_custom_call.1} parent=5 // pred_check_branch
        %231 = sbr.rel (%p228) target = $region12
      $region11: #{tpu_custom_call.1} parent=5 // pred_region
        %s232 = ssub.s32 %s25, 1
        // Predicated region
        $region13: #{tpu_custom_call.1} parent=11 // pred_check
          %p233 = pneg %p150
        $region14: #{tpu_custom_call.1} parent=11 // pred_check_branch
          %235 = sbr.rel (%p233) target = $region16
        $region15: #{tpu_custom_call.1} parent=11 // pred_region
          %s237 = ssub.s32 512, 512
          %238 = vsyncadd [#allocation9], %s237
          %s239 = sshll.u32 [#allocation10], 4
          %s240 = int_to_ptr.vmem [resolvable:$true] %s239
          %245 = dma.hbm_to_vmem [thread:$0]  %s4, 512, %s240, [#allocation9], 128, 128, 8
        $region16: #{tpu_custom_call.1} parent=11 // pred_fallthru
          _
        // Predicated region
        $region17: #{tpu_custom_call.1} parent=11 // pred_check
          %p246 = pneg %p171
        $region18: #{tpu_custom_call.1} parent=11 // pred_check_branch
          %248 = sbr.rel (%p246) target = $region20
        $region19: #{tpu_custom_call.1} parent=11 // pred_region
          _
        $region20: #{tpu_custom_call.1} parent=11 // pred_fallthru
          _
        // Predicated region
        $region21: #{tpu_custom_call.1} parent=11 // pred_check
          %p249 = pneg %p192
        $region22: #{tpu_custom_call.1} parent=11 // pred_check_branch
          %251 = sbr.rel (%p249) target = $region24
        $region23: #{tpu_custom_call.1} parent=11 // pred_region
          _
        $region24: #{tpu_custom_call.1} parent=11 // pred_fallthru
          _
      $region12: #{tpu_custom_call.1} parent=5 // pred_fallthru
        _
      %p252 = scmp.lt.s32.totalorder %s25, 2
      // Predicated region
      $region25: #{tpu_custom_call.1} parent=5 // pred_check
        %p253 = pneg %p252
      $region26: #{tpu_custom_call.1} parent=5 // pred_check_branch
        %255 = sbr.rel (%p253) target = $region28
      $region27: #{tpu_custom_call.1} parent=5 // pred_region
        // Predicated region
        $region29: #{tpu_custom_call.1} parent=27 // pred_check
          %p256 = pneg %p45
        $region30: #{tpu_custom_call.1} parent=27 // pred_check_branch
          %258 = sbr.rel (%p256) target = $region32
        $region31: #{tpu_custom_call.1} parent=27 // pred_region
          %s259 = sand.u32 %s35, 1
          %s260 = scalar_lea.sflag [#allocation3], %s259
          %s261 = sand.u32 %s35, 1
          %s262 = smul.addr %s261, 8
          %s263 = scalar_lea.vmem [#allocation2], %s262
          %s265 = ssub.s32 128, 128
          %266 = vsyncadd %s260, %s265
          %s267 = smul.addr %s25, 128
          %s268 = scalar_lea.hbm %s0, %s267
          %s270 = sshll.u32 %s263, 4
          %s271 = int_to_ptr.vmem [resolvable:$true] %s270
          %273 = dma.hbm_to_vmem [thread:$0]  %s268, 128, %s271, %s260
        $region32: #{tpu_custom_call.1} parent=27 // pred_fallthru
          _
        // Predicated region
        $region33: #{tpu_custom_call.1} parent=27 // pred_check
          %p274 = pneg %p71
        $region34: #{tpu_custom_call.1} parent=27 // pred_check_branch
          %276 = sbr.rel (%p274) target = $region36
        $region35: #{tpu_custom_call.1} parent=27 // pred_region
          %s277 = sand.u32 %s25, 1
          %s278 = scalar_lea.sflag [#allocation6], %s277
          %s279 = sand.u32 %s61, 1
          %s280 = smul.addr %s279, 128
          %s281 = scalar_lea.vmem [#allocation5], %s280
          %s282 = smul.u32 8, %s25
          %s284 = ssub.s32 2048, 2048
          %285 = vsyncadd %s278, %s284
          %s286 = smul.addr %s282, 2
          %s287 = smul.addr %s286, 128
          %s288 = scalar_lea.hbm %s1, %s287
          %s289 = sshll.u32 %s281, 4
          %s290 = int_to_ptr.vmem [resolvable:$true] %s289
          %295 = dma.hbm_to_vmem [thread:$0]  %s288, 2048, %s290, %s278, 128, 128, 8
        $region36: #{tpu_custom_call.1} parent=27 // pred_fallthru
          _
        // Predicated region
        $region37: #{tpu_custom_call.1} parent=27 // pred_check
          %p296 = pneg %p97
        $region38: #{tpu_custom_call.1} parent=27 // pred_check_branch
          %298 = sbr.rel (%p296) target = $region40
        $region39: #{tpu_custom_call.1} parent=27 // pred_region
          %s299 = sand.u32 %s25, 1
          %s300 = scalar_lea.sflag [#allocation6], %s299
          %s301 = sand.u32 %s87, 1
          %s302 = smul.addr %s301, 128
          %s303 = scalar_lea.vmem [#allocation7], %s302
          %s304 = smul.u32 8, %s25
          %s306 = ssub.s32 2048, 2048
          %307 = vsyncadd %s300, %s306
          %s308 = smul.addr %s304, 2
          %s309 = smul.addr %s308, 128
          %s310 = scalar_lea.hbm %s2, %s309
          %s311 = sshll.u32 %s303, 4
          %s312 = int_to_ptr.vmem [resolvable:$true] %s311
          %317 = dma.hbm_to_vmem [thread:$0]  %s310, 2048, %s312, %s300, 128, 128, 8
        $region40: #{tpu_custom_call.1} parent=27 // pred_fallthru
          _
        // Predicated region
        $region41: #{tpu_custom_call.1} parent=27 // pred_check
          %p318 = pneg %p123
        $region42: #{tpu_custom_call.1} parent=27 // pred_check_branch
          %320 = sbr.rel (%p318) target = $region44
        $region43: #{tpu_custom_call.1} parent=27 // pred_region
          %s321 = sand.u32 %s25, 1
          %s322 = scalar_lea.sflag [#allocation9], %s321
          %s323 = sand.u32 %s113, 1
          %s324 = smul.addr %s323, 8
          %s325 = scalar_lea.vmem [#allocation8], %s324
          %s327 = ssub.s32 128, 128
          %328 = vsyncadd %s322, %s327
          %s329 = smul.addr %s25, 128
          %s330 = scalar_lea.hbm %s3, %s329
          %s332 = sshll.u32 %s325, 4
          %s333 = int_to_ptr.vmem [resolvable:$true] %s332
          %335 = dma.hbm_to_vmem [thread:$0]  %s330, 128, %s333, %s322
        $region44: #{tpu_custom_call.1} parent=27 // pred_fallthru
          _
      $region28: #{tpu_custom_call.1} parent=5 // pred_fallthru
        _
      %p336 = scmp.le.s32.totalorder 1, %s25
      %p337 = scmp.lt.s32.totalorder %s25, 3
      %p338 = pnand %p336, %p337
      %p339 = pneg %p338
      // Predicated region
      $region45: #{tpu_custom_call.1} parent=5 // pred_check
        _
      $region46: #{tpu_custom_call.1} parent=5 // pred_check_branch
        %341 = sbr.rel (%p338) target = $region48
      $region47: #{tpu_custom_call.1} parent=5 // pred_region
        %s342 = ssub.s32 %s25, 1
        %s343 = sand.u32 %s38, 1
        %s344 = scalar_lea.sflag [#allocation3], %s343
        %s345 = sand.u32 %s38, 1
        %s346 = smul.addr %s345, 8
        %s347 = scalar_lea.vmem [#allocation2], %s346
        // Predicated region
        $region49: #{tpu_custom_call.1} parent=47 // pred_check
          %p348 = pneg %p51
        $region50: #{tpu_custom_call.1} parent=47 // pred_check_branch
          %350 = sbr.rel (%p348) target = $region52
        $region51: #{tpu_custom_call.1} parent=47 // pred_region
          %351 = dma.done %s344, 128
        $region52: #{tpu_custom_call.1} parent=47 // pred_fallthru
          _
        %s352 = sand.u32 %s30, 1
        %s353 = scalar_lea.sflag [#allocation6], %s352
        %s354 = sand.u32 %s64, 1
        %s355 = smul.addr %s354, 128
        %s356 = scalar_lea.vmem [#allocation5], %s355
        // Predicated region
        $region53: #{tpu_custom_call.1} parent=47 // pred_check
          %p357 = pneg %p77
        $region54: #{tpu_custom_call.1} parent=47 // pred_check_branch
          %359 = sbr.rel (%p357) target = $region56
        $region55: #{tpu_custom_call.1} parent=47 // pred_region
          %360 = dma.done %s353, 2048
        $region56: #{tpu_custom_call.1} parent=47 // pred_fallthru
          _
        %s361 = sand.u32 %s30, 1
        %s362 = scalar_lea.sflag [#allocation6], %s361
        %s363 = sand.u32 %s90, 1
        %s364 = smul.addr %s363, 128
        %s365 = scalar_lea.vmem [#allocation7], %s364
        // Predicated region
        $region57: #{tpu_custom_call.1} parent=47 // pred_check
          %p366 = pneg %p103
        $region58: #{tpu_custom_call.1} parent=47 // pred_check_branch
          %368 = sbr.rel (%p366) target = $region60
        $region59: #{tpu_custom_call.1} parent=47 // pred_region
          %369 = dma.done %s362, 2048
        $region60: #{tpu_custom_call.1} parent=47 // pred_fallthru
          _
        %s370 = sand.u32 %s30, 1
        %s371 = scalar_lea.sflag [#allocation9], %s370
        %s372 = sand.u32 %s116, 1
        %s373 = smul.addr %s372, 8
        %s374 = scalar_lea.vmem [#allocation8], %s373
        // Predicated region
        $region61: #{tpu_custom_call.1} parent=47 // pred_check
          %p375 = pneg %p129
        $region62: #{tpu_custom_call.1} parent=47 // pred_check_branch
          %377 = sbr.rel (%p375) target = $region64
        $region63: #{tpu_custom_call.1} parent=47 // pred_region
          %378 = dma.done %s371, 128
        $region64: #{tpu_custom_call.1} parent=47 // pred_fallthru
          _
        // Predicated region
        $region65: #{tpu_custom_call.1} parent=47 // pred_check
          %p379 = pneg %p150
        $region66: #{tpu_custom_call.1} parent=47 // pred_check_branch
          %381 = sbr.rel (%p379) target = $region68
        $region67: #{tpu_custom_call.1} parent=47 // pred_region
          %382 = dma.done [#allocation9], 512
        $region68: #{tpu_custom_call.1} parent=47 // pred_fallthru
          _
        %s383 = sand.u32 %s38, 1
        %s384 = scalar_lea.sflag [#allocation3], %s383
        %s385 = sand.u32 %s38, 1
        %s386 = smul.addr %s385, 8
        %s387 = scalar_lea.vmem [#allocation2], %s386
        %p388 = pneg %p51
        %p389 = pneg %p48
        %s390 = sand.u32 %s30, 1
        %s391 = scalar_lea.sflag [#allocation6], %s390
        %s392 = sand.u32 %s64, 1
        %s393 = smul.addr %s392, 128
        %s394 = scalar_lea.vmem [#allocation5], %s393
        %p395 = pneg %p77
        %p396 = pneg %p74
        %s397 = sand.u32 %s30, 1
        %s398 = scalar_lea.sflag [#allocation6], %s397
        %s399 = sand.u32 %s90, 1
        %s400 = smul.addr %s399, 128
        %s401 = scalar_lea.vmem [#allocation7], %s400
        %p402 = pneg %p103
        %p403 = pneg %p100
        %s404 = sand.u32 %s30, 1
        %s405 = scalar_lea.sflag [#allocation9], %s404
        %s406 = sand.u32 %s116, 1
        %s407 = smul.addr %s406, 8
        %s408 = scalar_lea.vmem [#allocation8], %s407
        %p409 = pneg %p129
        %p410 = pneg %p126
        %p411 = pneg %p150
        %p412 = pneg %p147
        %p413 = pneg %p171
        %p414 = pneg %p168
        %p415 = pneg %p192
        %p416 = pneg %p189
        %p417 = pneg %p218
        %p418 = pneg %p215
        %s419 = sand.u32 %s205, 1
        %s420 = scalar_lea.sflag [#allocation4], %s419
        %s421 = sand.u32 %s205, 1
        %s422 = smul.addr %s421, 8
        %s423 = scalar_lea.vmem [#allocation11], %s422
        %s424 = smul.u32 8, %s30
        %s425 = smul.u32 8, %s30
        %v426 = vld [vmem:[%s347] sm:$0xff]
        %v427 = vld [vmem:[%s374] sm:$0xff]
        %v428 = vld [vmem:[#allocation10] sm:$0xff]
        %v429 = vld [vmem:[#allocation10 + $0x8] sm:$0xff]
        %v430 = vld [vmem:[#allocation10 + $0x10] sm:$0xff]
        %v431 = vld [vmem:[#allocation10 + $0x18] sm:$0xff]
        %v432 = vld [vmem:[%s5] sm:$0x1]
        %v433 = vld [vmem:[%s6] sm:$0x1]
        %v435 = vlaneseq
        %v436 = vshrl.u32 %v435, 7
        %v437 = vsub.s32 0, %v436
        %v438 = vrot.slane %v432, %v437
        %vm440 = vcmask 261120
        %v442 = vsel %vm440, %v426, 0
        %444 = vmatprep.subr.mxu0 0.0
        %445 = vmatpush1.msra.mxu0 %v428
        %446 = vmatprep.subr.mxu0 0.0
        %447 = vmatpush1.msra.mxu0 %v429
        %448 = vmatprep.subr.mxu0 0.0
        %449 = vmatpush1.msra.mxu0 %v430
        %450 = vmatprep.subr.mxu0 0.0
        %451 = vmatpush1.msra.mxu0 %v431
        %452 = vmatprep.subr.mxu0 0.0
        %453 = vmatpush1.msra.mxu0 0.0
        %454 = vmatprep.subr.mxu0 0.0
        %455 = vmatpush1.msra.mxu0 0.0
        %456 = vmatprep.subr.mxu0 0.0
        %457 = vmatpush1.msra.mxu0 0.0
        %458 = vmatprep.subr.mxu0 0.0
        %459 = vmatpush1.msra.mxu0 0.0
        %460 = vmatprep.subr.mxu0 0.0
        %461 = vmatpush1.msra.mxu0 0.0
        %462 = vmatprep.subr.mxu0 0.0
        %463 = vmatpush1.msra.mxu0 0.0
        %464 = vmatprep.subr.mxu0 0.0
        %465 = vmatpush1.msra.mxu0 0.0
        %466 = vmatprep.subr.mxu0 0.0
        %467 = vmatpush1.msra.mxu0 0.0
        %468 = vmatprep.subr.mxu0 0.0
        %469 = vmatpush1.msra.mxu0 0.0
        %470 = vmatprep.subr.mxu0 0.0
        %471 = vmatpush1.msra.mxu0 0.0
        %472 = vmatprep.subr.mxu0 0.0
        %473 = vmatpush1.msra.mxu0 0.0
        %474 = vmatprep.subr.mxu0 0.0
        %475 = vmatpush1.msra.mxu0 0.0
        %476 = vmatprep.subr.mxu0 0.0
        %477 = vmatpush1.msra.mxu0 0.0
        %478 = vmatprep.subr.mxu0 0.0
        %479 = vmatpush1.msra.mxu0 0.0
        %480 = vmatprep.subr.mxu0 0.0
        %481 = vmatpush1.msra.mxu0 0.0
        %482 = vmatprep.subr.mxu0 0.0
        %483 = vmatpush1.msra.mxu0 0.0
        %484 = vmatprep.subr.mxu0 0.0
        %485 = vmatpush1.msra.mxu0 0.0
        %486 = vmatprep.subr.mxu0 0.0
        %487 = vmatpush1.msra.mxu0 0.0
        %488 = vmatprep.subr.mxu0 0.0
        %489 = vmatpush1.msra.mxu0 0.0
        %490 = vmatprep.subr.mxu0 0.0
        %491 = vmatpush1.msra.mxu0 0.0
        %492 = vmatprep.subr.mxu0 0.0
        %493 = vmatpush1.msra.mxu0 0.0
        %494 = vmatprep.subr.mxu0 0.0
        %495 = vmatpush1.msra.mxu0 0.0
        %496 = vmatprep.subr.mxu0 0.0
        %497 = vmatpush1.msra.mxu0 0.0
        %498 = vmatprep.subr.mxu0 0.0
        %499 = vmatpush1.msra.mxu0 0.0
        %500 = vmatprep.subr.mxu0 0.0
        %501 = vmatpush1.msra.mxu0 0.0
        %502 = vmatprep.subr.mxu0 0.0
        %503 = vmatpush1.msra.mxu0 0.0
        %504 = vmatprep.subr.mxu0 0.0
        %505 = vmatpush1.msra.mxu0 0.0
        %506 = vmatprep.subr.mxu0 0.0
        %507 = vmatpush1.msra.mxu0 0.0
        %508 = vmatprep.mubr.f32.mxu0 0.0
        %509 = vmatmul.mubr.f32.gmra.mrb[0].mxu0 %v442
        %v510 = vpop.f32.mrb[0].mxu0
        %v511 = vadd.f32 %v438, %v510
        %v512 = vpop.f32.mrb[0].mxu0
        %513 = vdwg.mxu0
        %v514 = vld [vmem:[%s365] sm:$0xff]
        %v515 = vld [vmem:[%s365 + $0x10] sm:$0xff]
        %v516 = vld [vmem:[%s365 + $0x20] sm:$0xff]
        %v517 = vld [vmem:[%s365 + $0x30] sm:$0xff]
        %v518 = vld [vmem:[%s365 + $0x40] sm:$0xff]
        %v519 = vld [vmem:[%s365 + $0x50] sm:$0xff]
        %v520 = vld [vmem:[%s365 + $0x60] sm:$0xff]
        %v521 = vld [vmem:[%s365 + $0x70] sm:$0xff]
        %v523 = vcombine.high %v511, %v511
        %v525 = vunpack.c.l.s4 1966171168
        %v526 = vunpack.c.0.s8 %v525
        %v527 = vlaneseq
        %v528 = vshrl.u32 %v527, 7
        %v529 = vsub.s32 %v526, %v528
        %v530 = vrot.slane %v511, %v529
        %v532 = vunpack.c.l.s4 1966171168
        %v533 = vunpack.c.0.s8 %v532
        %v534 = vlaneseq
        %v535 = vshrl.u32 %v534, 7
        %v536 = vsub.s32 %v533, %v535
        %v537 = vrot.slane %v523, %v536
        %v538 = vcombine.high %v530, %v530
        %v539 = vcombine.high %v537, %v537
        %v541 = vunpack.c.l.s4 1966171168
        %v542 = vunpack.c.0.s8 %v541
        %v543 = vlaneseq
        %v544 = vshrl.u32 %v543, 7
        %v545 = vsub.s32 %v542, %v544
        %v546 = vrot.slane %v530, %v545
        %v548 = vunpack.c.l.s4 1966171168
        %v549 = vunpack.c.0.s8 %v548
        %v550 = vlaneseq
        %v551 = vshrl.u32 %v550, 7
        %v552 = vsub.s32 %v549, %v551
        %v553 = vrot.slane %v537, %v552
        %v555 = vunpack.c.l.s4 1966171168
        %v556 = vunpack.c.0.s8 %v555
        %v557 = vlaneseq
        %v558 = vshrl.u32 %v557, 7
        %v559 = vsub.s32 %v556, %v558
        %v560 = vrot.slane %v538, %v559
        %v562 = vunpack.c.l.s4 1966171168
        %v563 = vunpack.c.0.s8 %v562
        %v564 = vlaneseq
        %v565 = vshrl.u32 %v564, 7
        %v566 = vsub.s32 %v563, %v565
        %v567 = vrot.slane %v539, %v566
        %v568 = vcombine.high %v546, %v546
        %v569 = vcombine.high %v553, %v553
        %v570 = vcombine.high %v560, %v560
        %v571 = vcombine.high %v567, %v567
        %v572 = vlaneseq
        %v573 = vshrl.u32 %v572, 7
        %v574 = vsub.s32 0, %v573
        %v575 = vrot.slane %v546, %v574
        %v576 = vlaneseq
        %v577 = vshrl.u32 %v576, 7
        %v578 = vsub.s32 0, %v577
        %v579 = vrot.slane %v560, %v578
        %v580 = vlaneseq
        %v581 = vshrl.u32 %v580, 7
        %v582 = vsub.s32 0, %v581
        %v583 = vrot.slane %v568, %v582
        %v584 = vlaneseq
        %v585 = vshrl.u32 %v584, 7
        %v586 = vsub.s32 0, %v585
        %v587 = vrot.slane %v570, %v586
        %v588 = vlaneseq
        %v589 = vshrl.u32 %v588, 7
        %v590 = vsub.s32 0, %v589
        %v591 = vrot.slane %v553, %v590
        %v592 = vlaneseq
        %v593 = vshrl.u32 %v592, 7
        %v594 = vsub.s32 0, %v593
        %v595 = vrot.slane %v567, %v594
        %v596 = vlaneseq
        %v597 = vshrl.u32 %v596, 7
        %v598 = vsub.s32 0, %v597
        %v599 = vrot.slane %v569, %v598
        %v600 = vlaneseq
        %v601 = vshrl.u32 %v600, 7
        %v602 = vsub.s32 0, %v601
        %v603 = vrot.slane %v571, %v602
        %v612 = vadd.f32 %v514, %v575
        %v613 = vadd.f32 %v515, %v579
        %v614 = vadd.f32 %v516, %v583
        %v615 = vadd.f32 %v517, %v587
        %v616 = vadd.f32 %v518, %v591
        %v617 = vadd.f32 %v519, %v595
        %v618 = vadd.f32 %v520, %v599
        %v619 = vadd.f32 %v521, %v603
        %v620 = vtanh.pop %v612
        %v621 = vtanh.pop %v613
        %v622 = vtanh.pop %v614
        %v623 = vtanh.pop %v615
        %v624 = vtanh.pop %v616
        %v625 = vtanh.pop %v617
        %v626 = vtanh.pop %v618
        %v627 = vtanh.pop %v619
        %v629 = vlaneseq
        %v630 = vshrl.u32 %v629, 7
        %v631 = vsub.s32 0, %v630
        %v632 = vrot.slane %v433, %v631
        %v634 = vmul.f32 %v620, %v632
        %v635 = vmul.f32 %v621, %v632
        %v636 = vmul.f32 %v622, %v632
        %v637 = vmul.f32 %v623, %v632
        %v638 = vmul.f32 %v624, %v632
        %v639 = vmul.f32 %v625, %v632
        %v640 = vmul.f32 %v626, %v632
        %v641 = vmul.f32 %v627, %v632
        %v642 = vsel %vm440, %v634, 0.0
        %643 = vadd.xlane.f32.xlu0 %v642
        %v644 = vpop.xlane.xlu0 %643
        %v645 = vsel %vm440, %v635, 0.0
        %646 = vadd.xlane.f32.xlu0 %v645
        %v647 = vpop.xlane.xlu0 %646
        %v648 = vsel %vm440, %v636, 0.0
        %649 = vadd.xlane.f32.xlu0 %v648
        %v650 = vpop.xlane.xlu0 %649
        %v651 = vsel %vm440, %v637, 0.0
        %652 = vadd.xlane.f32.xlu0 %v651
        %v653 = vpop.xlane.xlu0 %652
        %v654 = vsel %vm440, %v638, 0.0
        %655 = vadd.xlane.f32.xlu0 %v654
        %v656 = vpop.xlane.xlu0 %655
        %v657 = vsel %vm440, %v639, 0.0
        %658 = vadd.xlane.f32.xlu0 %v657
        %v659 = vpop.xlane.xlu0 %658
        %v660 = vsel %vm440, %v640, 0.0
        %661 = vadd.xlane.f32.xlu0 %v660
        %v662 = vpop.xlane.xlu0 %661
        %v663 = vsel %vm440, %v641, 0.0
        %664 = vadd.xlane.f32.xlu0 %v663
        %v665 = vpop.xlane.xlu0 %664
        %v666 = vld [vmem:[%s365 + $0x8] sm:$0xff]
        %v667 = vld [vmem:[%s365 + $0x18] sm:$0xff]
        %v668 = vld [vmem:[%s365 + $0x28] sm:$0xff]
        %v669 = vld [vmem:[%s365 + $0x38] sm:$0xff]
        %v670 = vld [vmem:[%s365 + $0x48] sm:$0xff]
        %v671 = vld [vmem:[%s365 + $0x58] sm:$0xff]
        %v672 = vld [vmem:[%s365 + $0x68] sm:$0xff]
        %v673 = vld [vmem:[%s365 + $0x78] sm:$0xff]
        %v674 = vadd.f32 %v666, %v575
        %v675 = vadd.f32 %v667, %v579
        %v676 = vadd.f32 %v668, %v583
        %v677 = vadd.f32 %v669, %v587
        %v678 = vadd.f32 %v670, %v591
        %v679 = vadd.f32 %v671, %v595
        %v680 = vadd.f32 %v672, %v599
        %v681 = vadd.f32 %v673, %v603
        %v682 = vtanh.pop %v674
        %v683 = vtanh.pop %v675
        %v684 = vtanh.pop %v676
        %v685 = vtanh.pop %v677
        %v686 = vtanh.pop %v678
        %v687 = vtanh.pop %v679
        %v688 = vtanh.pop %v680
        %v689 = vtanh.pop %v681
        %v690 = vmul.f32 %v682, %v632
        %v691 = vmul.f32 %v683, %v632
        %v692 = vmul.f32 %v684, %v632
        %v693 = vmul.f32 %v685, %v632
        %v694 = vmul.f32 %v686, %v632
        %v695 = vmul.f32 %v687, %v632
        %v696 = vmul.f32 %v688, %v632
        %v697 = vmul.f32 %v689, %v632
        %v698 = vsel %vm440, %v690, 0.0
        %699 = vadd.xlane.f32.xlu0 %v698
        %v700 = vpop.xlane.xlu0 %699
        %v701 = vsel %vm440, %v691, 0.0
        %702 = vadd.xlane.f32.xlu0 %v701
        %v703 = vpop.xlane.xlu0 %702
        %v704 = vsel %vm440, %v692, 0.0
        %705 = vadd.xlane.f32.xlu0 %v704
        %v706 = vpop.xlane.xlu0 %705
        %v707 = vsel %vm440, %v693, 0.0
        %708 = vadd.xlane.f32.xlu0 %v707
        %v709 = vpop.xlane.xlu0 %708
        %v710 = vsel %vm440, %v694, 0.0
        %711 = vadd.xlane.f32.xlu0 %v710
        %v712 = vpop.xlane.xlu0 %711
        %v713 = vsel %vm440, %v695, 0.0
        %714 = vadd.xlane.f32.xlu0 %v713
        %v715 = vpop.xlane.xlu0 %714
        %v716 = vsel %vm440, %v696, 0.0
        %717 = vadd.xlane.f32.xlu0 %v716
        %v718 = vpop.xlane.xlu0 %717
        %v719 = vsel %vm440, %v697, 0.0
        %720 = vadd.xlane.f32.xlu0 %v719
        %v721 = vpop.xlane.xlu0 %720
        %v730 = vlaneseq
        %v731 = vand.u32 %v730, 127
        %v732 = vlaneseq
        %v733 = vshrl.u32 %v732, 7
        %v734 = vsub.s32 %v731, %v733
        %v735 = vrot.slane %v644, %v734
        %v736 = vlaneseq
        %v737 = vshrl.u32 %v736, 7
        %v738 = vsub.s32 %v731, %v737
        %v739 = vrot.slane %v647, %v738
        %v740 = vlaneseq
        %v741 = vshrl.u32 %v740, 7
        %v742 = vsub.s32 %v731, %v741
        %v743 = vrot.slane %v650, %v742
        %v744 = vlaneseq
        %v745 = vshrl.u32 %v744, 7
        %v746 = vsub.s32 %v731, %v745
        %v747 = vrot.slane %v653, %v746
        %v748 = vlaneseq
        %v749 = vshrl.u32 %v748, 7
        %v750 = vsub.s32 %v731, %v749
        %v751 = vrot.slane %v656, %v750
        %v752 = vlaneseq
        %v753 = vshrl.u32 %v752, 7
        %v754 = vsub.s32 %v731, %v753
        %v755 = vrot.slane %v659, %v754
        %v756 = vlaneseq
        %v757 = vshrl.u32 %v756, 7
        %v758 = vsub.s32 %v731, %v757
        %v759 = vrot.slane %v662, %v758
        %v760 = vlaneseq
        %v761 = vshrl.u32 %v760, 7
        %v762 = vsub.s32 %v731, %v761
        %v763 = vrot.slane %v665, %v762
        %vm764 = vcmask 1041409
        %v765 = vsel %vm764, %v739, %v735
        %vm766 = vcmask 1042434
        %v767 = vsel %vm766, %v743, %v765
        %vm768 = vcmask 1043459
        %v769 = vsel %vm768, %v747, %v767
        %vm770 = vcmask 1044484
        %v771 = vsel %vm770, %v751, %v769
        %vm772 = vcmask 1045509
        %v773 = vsel %vm772, %v755, %v771
        %vm774 = vcmask 1046534
        %v775 = vsel %vm774, %v759, %v773
        %vm776 = vcmask 1047559
        %v777 = vsel %vm776, %v763, %v775
        %v787 = vadd.s32 %v731, 4294967288
        %v788 = vlaneseq
        %v789 = vshrl.u32 %v788, 7
        %v790 = vsub.s32 %v787, %v789
        %v791 = vrot.slane %v700, %v790
        %v792 = vlaneseq
        %v793 = vshrl.u32 %v792, 7
        %v794 = vsub.s32 %v787, %v793
        %v795 = vrot.slane %v703, %v794
        %v796 = vlaneseq
        %v797 = vshrl.u32 %v796, 7
        %v798 = vsub.s32 %v787, %v797
        %v799 = vrot.slane %v706, %v798
        %v800 = vlaneseq
        %v801 = vshrl.u32 %v800, 7
        %v802 = vsub.s32 %v787, %v801
        %v803 = vrot.slane %v709, %v802
        %v804 = vlaneseq
        %v805 = vshrl.u32 %v804, 7
        %v806 = vsub.s32 %v787, %v805
        %v807 = vrot.slane %v712, %v806
        %v808 = vlaneseq
        %v809 = vshrl.u32 %v808, 7
        %v810 = vsub.s32 %v787, %v809
        %v811 = vrot.slane %v715, %v810
        %v812 = vlaneseq
        %v813 = vshrl.u32 %v812, 7
        %v814 = vsub.s32 %v787, %v813
        %v815 = vrot.slane %v718, %v814
        %v816 = vlaneseq
        %v817 = vshrl.u32 %v816, 7
        %v818 = vsub.s32 %v787, %v817
        %v819 = vrot.slane %v721, %v818
        %v820 = vsel %vm764, %v795, %v791
        %v821 = vsel %vm766, %v799, %v820
        %v822 = vsel %vm768, %v803, %v821
        %v823 = vsel %vm770, %v807, %v822
        %v824 = vsel %vm772, %v811, %v823
        %v825 = vsel %vm774, %v815, %v824
        %v826 = vsel %vm776, %v819, %v825
        %vm828 = vcmask 64512
        %v829 = vsel %vm828, %v777, %v826
        %vm830 = vcmask 130048
        %v831 = vsel %vm830, %v829, -inf
        %832 = vmax.xlane.f32.xlu0 %v831
        %v833 = vpop.xlane.xlu0 %832
        %v834 = vsub.f32 %v829, %v833
        %v835 = vmul.f32 %v834, 1.442695
        %v836 = vpow.pop %v835
        %v837 = vmul.f32 %v836, %v427
        %v838 = vsel %vm830, %v837, 0.0
        %839 = vadd.xlane.f32.xlu0 %v838
        %v840 = vpop.xlane.xlu0 %839
        %vm841 = vcmp.eq.f32.partialorder %v840, 0.0
        %v842 = vsel %vm841, 1.0, %v840
        %v843 = vrcp.pop %v842
        %v844 = vmul.f32 %v837, %v843
        %v845 = vld [vmem:[%s356] sm:$0xff]
        %v846 = vld [vmem:[%s356 + $0x10] sm:$0xff]
        %v847 = vld [vmem:[%s356 + $0x20] sm:$0xff]
        %v848 = vld [vmem:[%s356 + $0x30] sm:$0xff]
        %v849 = vld [vmem:[%s356 + $0x40] sm:$0xff]
        %v850 = vld [vmem:[%s356 + $0x50] sm:$0xff]
        %v851 = vld [vmem:[%s356 + $0x60] sm:$0xff]
        %v852 = vld [vmem:[%s356 + $0x70] sm:$0xff]
        %v853 = vlaneseq
        %v854 = vshrl.u32 %v853, 7
        %v855 = vsub.s32 0, %v854
        %v856 = vrot.slane %v844, %v855
        %858 = vbcast.lane.b32.xlu0 %v856, 256
        %v859 = vpop.permute.xlu0 %858
        %v860 = vlaneseq
        %v861 = vshrl.u32 %v860, 7
        %v862 = vsub.s32 1, %v861
        %v863 = vrot.slane %v844, %v862
        %865 = vbcast.lane.b32.xlu0 %v863, 256
        %v866 = vpop.permute.xlu0 %865
        %v867 = vlaneseq
        %v868 = vshrl.u32 %v867, 7
        %v869 = vsub.s32 2, %v868
        %v870 = vrot.slane %v844, %v869
        %872 = vbcast.lane.b32.xlu0 %v870, 256
        %v873 = vpop.permute.xlu0 %872
        %v874 = vlaneseq
        %v875 = vshrl.u32 %v874, 7
        %v876 = vsub.s32 3, %v875
        %v877 = vrot.slane %v844, %v876
        %879 = vbcast.lane.b32.xlu0 %v877, 256
        %v880 = vpop.permute.xlu0 %879
        %v881 = vlaneseq
        %v882 = vshrl.u32 %v881, 7
        %v883 = vsub.s32 4, %v882
        %v884 = vrot.slane %v844, %v883
        %886 = vbcast.lane.b32.xlu0 %v884, 256
        %v887 = vpop.permute.xlu0 %886
        %v888 = vlaneseq
        %v889 = vshrl.u32 %v888, 7
        %v890 = vsub.s32 5, %v889
        %v891 = vrot.slane %v844, %v890
        %893 = vbcast.lane.b32.xlu0 %v891, 256
        %v894 = vpop.permute.xlu0 %893
        %v895 = vlaneseq
        %v896 = vshrl.u32 %v895, 7
        %v897 = vsub.s32 6, %v896
        %v898 = vrot.slane %v844, %v897
        %900 = vbcast.lane.b32.xlu0 %v898, 256
        %v901 = vpop.permute.xlu0 %900
        %v902 = vlaneseq
        %v903 = vshrl.u32 %v902, 7
        %v904 = vsub.s32 7, %v903
        %v905 = vrot.slane %v844, %v904
        %907 = vbcast.lane.b32.xlu0 %v905, 256
        %v908 = vpop.permute.xlu0 %907
        %v909 = vmul.f32 %v845, %v859
        %v910 = vmul.f32 %v846, %v866
        %v911 = vmul.f32 %v847, %v873
        %v912 = vmul.f32 %v848, %v880
        %v913 = vmul.f32 %v849, %v887
        %v914 = vmul.f32 %v850, %v894
        %v915 = vmul.f32 %v851, %v901
        %v916 = vmul.f32 %v852, %v908
        %v917 = vsel %vm440, %v909, 0.0
        %v918 = vrot.slane %v917, 4
        %v919 = vadd.f32 %v917, %v918
        %v920 = vrot.slane %v919, 2
        %v921 = vadd.f32 %v919, %v920
        %v922 = vrot.slane %v921, 1
        %v923 = vadd.f32 %v921, %v922
        %v924 = vsel %vm440, %v910, 0.0
        %v925 = vrot.slane %v924, 4
        %v926 = vadd.f32 %v924, %v925
        %v927 = vrot.slane %v926, 2
        %v928 = vadd.f32 %v926, %v927
        %v929 = vrot.slane %v928, 1
        %v930 = vadd.f32 %v928, %v929
        %v931 = vsel %vm440, %v911, 0.0
        %v932 = vrot.slane %v931, 4
        %v933 = vadd.f32 %v931, %v932
        %v934 = vrot.slane %v933, 2
        %v935 = vadd.f32 %v933, %v934
        %v936 = vrot.slane %v935, 1
        %v937 = vadd.f32 %v935, %v936
        %v938 = vsel %vm440, %v912, 0.0
        %v939 = vrot.slane %v938, 4
        %v940 = vadd.f32 %v938, %v939
        %v941 = vrot.slane %v940, 2
        %v942 = vadd.f32 %v940, %v941
        %v943 = vrot.slane %v942, 1
        %v944 = vadd.f32 %v942, %v943
        %v945 = vsel %vm440, %v913, 0.0
        %v946 = vrot.slane %v945, 4
        %v947 = vadd.f32 %v945, %v946
        %v948 = vrot.slane %v947, 2
        %v949 = vadd.f32 %v947, %v948
        %v950 = vrot.slane %v949, 1
        %v951 = vadd.f32 %v949, %v950
        %v952 = vsel %vm440, %v914, 0.0
        %v953 = vrot.slane %v952, 4
        %v954 = vadd.f32 %v952, %v953
        %v955 = vrot.slane %v954, 2
        %v956 = vadd.f32 %v954, %v955
        %v957 = vrot.slane %v956, 1
        %v958 = vadd.f32 %v956, %v957
        %v959 = vsel %vm440, %v915, 0.0
        %v960 = vrot.slane %v959, 4
        %v961 = vadd.f32 %v959, %v960
        %v962 = vrot.slane %v961, 2
        %v963 = vadd.f32 %v961, %v962
        %v964 = vrot.slane %v963, 1
        %v965 = vadd.f32 %v963, %v964
        %v966 = vsel %vm440, %v916, 0.0
        %v967 = vrot.slane %v966, 4
        %v968 = vadd.f32 %v966, %v967
        %v969 = vrot.slane %v968, 2
        %v970 = vadd.f32 %v968, %v969
        %v971 = vrot.slane %v970, 1
        %v972 = vadd.f32 %v970, %v971
        %v973 = vadd.f32 %v923, 0.0
        %v974 = vadd.f32 %v930, 0.0
        %v975 = vadd.f32 %v937, 0.0
        %v976 = vadd.f32 %v944, 0.0
        %v977 = vadd.f32 %v951, 0.0
        %v978 = vadd.f32 %v958, 0.0
        %v979 = vadd.f32 %v965, 0.0
        %v980 = vadd.f32 %v972, 0.0
        %v981 = vld [vmem:[%s356 + $0x8] sm:$0xff]
        %v982 = vld [vmem:[%s356 + $0x18] sm:$0xff]
        %v983 = vld [vmem:[%s356 + $0x28] sm:$0xff]
        %v984 = vld [vmem:[%s356 + $0x38] sm:$0xff]
        %v985 = vld [vmem:[%s356 + $0x48] sm:$0xff]
        %v986 = vld [vmem:[%s356 + $0x58] sm:$0xff]
        %v987 = vld [vmem:[%s356 + $0x68] sm:$0xff]
        %v988 = vld [vmem:[%s356 + $0x78] sm:$0xff]
        %s990 = sor.u32 256, 8
        %991 = vbcast.lane.b32.xlu0 %v856, %s990
        %v992 = vpop.permute.xlu0 %991
        %s994 = sor.u32 256, 8
        %995 = vbcast.lane.b32.xlu0 %v863, %s994
        %v996 = vpop.permute.xlu0 %995
        %s998 = sor.u32 256, 8
        %999 = vbcast.lane.b32.xlu0 %v870, %s998
        %v1000 = vpop.permute.xlu0 %999
        %s1002 = sor.u32 256, 8
        %1003 = vbcast.lane.b32.xlu0 %v877, %s1002
        %v1004 = vpop.permute.xlu0 %1003
        %s1006 = sor.u32 256, 8
        %1007 = vbcast.lane.b32.xlu0 %v884, %s1006
        %v1008 = vpop.permute.xlu0 %1007
        %s1010 = sor.u32 256, 8
        %1011 = vbcast.lane.b32.xlu0 %v891, %s1010
        %v1012 = vpop.permute.xlu0 %1011
        %s1014 = sor.u32 256, 8
        %1015 = vbcast.lane.b32.xlu0 %v898, %s1014
        %v1016 = vpop.permute.xlu0 %1015
        %s1018 = sor.u32 256, 8
        %1019 = vbcast.lane.b32.xlu0 %v905, %s1018
        %v1020 = vpop.permute.xlu0 %1019
        %v1021 = vmul.f32 %v981, %v992
        %v1022 = vmul.f32 %v982, %v996
        %v1023 = vmul.f32 %v983, %v1000
        %v1024 = vmul.f32 %v984, %v1004
        %v1025 = vmul.f32 %v985, %v1008
        %v1026 = vmul.f32 %v986, %v1012
        %v1027 = vmul.f32 %v987, %v1016
        %v1028 = vmul.f32 %v988, %v1020
        %v1029 = vsel %vm440, %v1021, 0.0
        %v1030 = vrot.slane %v1029, 4
        %v1031 = vadd.f32 %v1029, %v1030
        %v1032 = vrot.slane %v1031, 2
        %v1033 = vadd.f32 %v1031, %v1032
        %v1034 = vrot.slane %v1033, 1
        %v1035 = vadd.f32 %v1033, %v1034
        %v1036 = vsel %vm440, %v1022, 0.0
        %v1037 = vrot.slane %v1036, 4
        %v1038 = vadd.f32 %v1036, %v1037
        %v1039 = vrot.slane %v1038, 2
        %v1040 = vadd.f32 %v1038, %v1039
        %v1041 = vrot.slane %v1040, 1
        %v1042 = vadd.f32 %v1040, %v1041
        %v1043 = vsel %vm440, %v1023, 0.0
        %v1044 = vrot.slane %v1043, 4
        %v1045 = vadd.f32 %v1043, %v1044
        %v1046 = vrot.slane %v1045, 2
        %v1047 = vadd.f32 %v1045, %v1046
        %v1048 = vrot.slane %v1047, 1
        %v1049 = vadd.f32 %v1047, %v1048
        %v1050 = vsel %vm440, %v1024, 0.0
        %v1051 = vrot.slane %v1050, 4
        %v1052 = vadd.f32 %v1050, %v1051
        %v1053 = vrot.slane %v1052, 2
        %v1054 = vadd.f32 %v1052, %v1053
        %v1055 = vrot.slane %v1054, 1
        %v1056 = vadd.f32 %v1054, %v1055
        %v1057 = vsel %vm440, %v1025, 0.0
        %v1058 = vrot.slane %v1057, 4
        %v1059 = vadd.f32 %v1057, %v1058
        %v1060 = vrot.slane %v1059, 2
        %v1061 = vadd.f32 %v1059, %v1060
        %v1062 = vrot.slane %v1061, 1
        %v1063 = vadd.f32 %v1061, %v1062
        %v1064 = vsel %vm440, %v1026, 0.0
        %v1065 = vrot.slane %v1064, 4
        %v1066 = vadd.f32 %v1064, %v1065
        %v1067 = vrot.slane %v1066, 2
        %v1068 = vadd.f32 %v1066, %v1067
        %v1069 = vrot.slane %v1068, 1
        %v1070 = vadd.f32 %v1068, %v1069
        %v1071 = vsel %vm440, %v1027, 0.0
        %v1072 = vrot.slane %v1071, 4
        %v1073 = vadd.f32 %v1071, %v1072
        %v1074 = vrot.slane %v1073, 2
        %v1075 = vadd.f32 %v1073, %v1074
        %v1076 = vrot.slane %v1075, 1
        %v1077 = vadd.f32 %v1075, %v1076
        %v1078 = vsel %vm440, %v1028, 0.0
        %v1079 = vrot.slane %v1078, 4
        %v1080 = vadd.f32 %v1078, %v1079
        %v1081 = vrot.slane %v1080, 2
        %v1082 = vadd.f32 %v1080, %v1081
        %v1083 = vrot.slane %v1082, 1
        %v1084 = vadd.f32 %v1082, %v1083
        %v1085 = vadd.f32 %v973, %v1035
        %v1086 = vadd.f32 %v974, %v1042
        %v1087 = vadd.f32 %v975, %v1049
        %v1088 = vadd.f32 %v976, %v1056
        %v1089 = vadd.f32 %v977, %v1063
        %v1090 = vadd.f32 %v978, %v1070
        %v1091 = vadd.f32 %v979, %v1077
        %v1092 = vadd.f32 %v980, %v1084
        %v1101 = vsel %vm764, %v1086, %v1085
        %v1102 = vsel %vm766, %v1087, %v1101
        %v1103 = vsel %vm768, %v1088, %v1102
        %v1104 = vsel %vm770, %v1089, %v1103
        %v1105 = vsel %vm772, %v1090, %v1104
        %v1106 = vsel %vm774, %v1091, %v1105
        %v1107 = vsel %vm776, %v1092, %v1106
        %1109 = vst.msk [vmem:[%s423] sm:$0xff] %vm440, %v1107
        %s1110 = sand.u32 %s205, 1
        %s1111 = scalar_lea.sflag [#allocation4], %s1110
        %s1112 = sand.u32 %s205, 1
        %s1113 = smul.addr %s1112, 8
        %s1114 = scalar_lea.vmem [#allocation11], %s1113
        // Predicated region
        $region69: #{tpu_custom_call.1} parent=47 // pred_check
          %p1115 = pneg %p215
        $region70: #{tpu_custom_call.1} parent=47 // pred_check_branch
          %1117 = sbr.rel (%p1115) target = $region72
        $region71: #{tpu_custom_call.1} parent=47 // pred_region
          %s1119 = ssub.s32 128, 128
          %1120 = vsyncadd %s1111, %s1119
          %s1121 = smul.addr %s30, 128
          %s1122 = scalar_lea.hbm %s7, %s1121
          %s1124 = sshll.u32 %s1114, 4
          %s1125 = int_to_ptr.vmem [resolvable:$true] %s1124
          %1127 = dma.vmem_to_hbm [thread:$0]  %s1125, 128, %s1122, %s1111
        $region72: #{tpu_custom_call.1} parent=47 // pred_fallthru
          _
      $region48: #{tpu_custom_call.1} parent=5 // pred_fallthru
        _
      %p1128 = scmp.le.s32.totalorder 2, %s25
      // Predicated region
      $region73: #{tpu_custom_call.1} parent=5 // pred_check
        %p1129 = pneg %p1128
      $region74: #{tpu_custom_call.1} parent=5 // pred_check_branch
        %1131 = sbr.rel (%p1129) target = $region76
      $region75: #{tpu_custom_call.1} parent=5 // pred_region
        %s1132 = ssub.s32 %s25, 2
        // Predicated region
        $region77: #{tpu_custom_call.1} parent=75 // pred_check
          %p1133 = pneg %p221
        $region78: #{tpu_custom_call.1} parent=75 // pred_check_branch
          %1135 = sbr.rel (%p1133) target = $region80
        $region79: #{tpu_custom_call.1} parent=75 // pred_region
          %s1136 = sand.u32 %s206, 1
          %s1137 = scalar_lea.sflag [#allocation4], %s1136
          %s1138 = sand.u32 %s206, 1
          %s1139 = smul.addr %s1138, 8
          %s1140 = scalar_lea.vmem [#allocation11], %s1139
          %1141 = dma.done %s1137, 128
        $region80: #{tpu_custom_call.1} parent=75 // pred_fallthru
          _
      $region76: #{tpu_custom_call.1} parent=5 // pred_fallthru
        _
    $region6: #{tpu_custom_call.1} parent=1 // loop_footer
      %s29 = sadd.s32 1, %s25
    $region7: #{tpu_custom_call.1} parent=1 // loop_footer_branch
      %24 = sbr.rel target = $region3
    $region8: #{tpu_custom_call.1} parent=1 // loop_exit
      _
    %1142 = vsyncpa [#allocation3], 1
    %s1143 = scalar_lea.sflag [#allocation3], 1
    %1144 = vsyncpa %s1143, 1
    %1145 = vsyncpa [#allocation6], 1
    %s1146 = scalar_lea.sflag [#allocation6], 1
    %1147 = vsyncpa %s1146, 1
    %1148 = vsyncpa [#allocation9], 1
    %s1149 = scalar_lea.sflag [#allocation9], 1
    %1150 = vsyncpa %s1149, 1
    %1151 = vsyncpa [#allocation4], 1
    %s1152 = scalar_lea.sflag [#allocation4], 1
    %1153 = vsyncpa %s1152, 1

</llo_original>
